<compile_context>
chip_gen: v7x
topology: tpu7x:2x2x1
jax: 0.10.0
libtpu: 0.0.40
codegen_flags: <defaults>
</compile_context>

<pallas_src>
import jax
import jax.numpy as jnp
import numpy as np
from jax.experimental import pallas as pl
from jax.experimental.pallas import tpu as pltpu


def _yolo_kernel(params_ref, gxgy_ref, pred_ref, out_ref):
    """Decode one image's YOLO head.

    params_ref: VMEM (A*C5, 4)  resident per-row: [scale, is_wh, sel_gx, sel_gy]
    gxgy_ref:   VMEM (2, GG)    resident per-col: row 0 = gx, row 1 = gy
    pred_ref:   VMEM (A*C5, GG) raw predictions for this batch element
    out_ref:    VMEM (A*C5, GG) decoded output
    """
    p = pred_ref[...].astype(jnp.float32)          # (R, GG); bf16 head input OK

    scale = params_ref[:, 0:1]                     # (R, 1)
    is_wh = params_ref[:, 1:2] > 0.5               # (R, 1) bool
    sel_gx = params_ref[:, 2:3]                    # (R, 1) 0/1
    sel_gy = params_ref[:, 3:4]                    # (R, 1) 0/1

    gx = gxgy_ref[0:1, :]                          # (1, GG)
    gy = gxgy_ref[1:2, :]                          # (1, GG)

    # One EUP pass: w/h rows need exp(p); all other rows need
    # sigmoid(p) = 1 / (1 + exp(-p)).  Exact divide keeps 1e-5 parity.
    t = jnp.where(is_wh, p, -p)
    e = jnp.exp(t)
    sig = 1.0 / (1.0 + e)
    base = jnp.where(is_wh, e, sig)                # select: no inf*0 -> NaN

    # x rows add gx, y rows add gy, others add 0 (per-row 0/1 selectors).
    offset = sel_gx * gx + sel_gy * gy             # (R,1)*(1,GG) -> (R,GG)

    # x/y: (sigmoid + grid) * stride; w/h: exp * anchor; conf/cls: sigmoid * 1
    out_ref[...] = ((base + offset) * scale).astype(out_ref.dtype)


def _make_side_inputs(anchors, num_classes, g, img_dim):
    """Small resident side inputs: per-row params and per-column grid offsets."""
    A = len(anchors)
    C5 = num_classes + 5
    stride = float(img_dim) / float(g)

    params = np.zeros((A * C5, 4), dtype=np.float32)
    for a_i, (a_w, a_h) in enumerate(anchors):
        r = a_i * C5
        params[r:r + C5, 0] = 1.0           # conf/cls scale
        params[r + 0, 0] = stride           # x scale
        params[r + 1, 0] = stride           # y scale
        params[r + 2, 0] = float(a_w)       # w: (a_w/stride)*stride == a_w
        params[r + 3, 0] = float(a_h)       # h
        params[r + 2, 1] = 1.0              # is_wh
        params[r + 3, 1] = 1.0
        params[r + 0, 2] = 1.0              # sel_gx (x row)
        params[r + 1, 3] = 1.0              # sel_gy (y row)

    cols = np.arange(g * g, dtype=np.int64)
    gxgy = np.stack([cols % g, cols // g]).astype(np.float32)  # (2, GG)
    return jnp.asarray(params), jnp.asarray(gxgy)


def yolo_layer_forward(x, anchors, num_classes, img_dim):
    """Pallas implementation of YOLOLayer.forward(x, targets=None, img_dim=img_dim)."""
    N, C, G, G2 = x.shape
    assert G == G2
    A = len(anchors)
    C5 = num_classes + 5
    assert C == A * C5
    GG = G * G
    R = A * C5

    # Glue: contiguous reshape only (no transpose, no dtype-cast pass).
    pred = x.reshape(N, R, GG)

    params, gxgy = _make_side_inputs(anchors, num_classes, G, img_dim)

    out3d = pl.pallas_call(
        _yolo_kernel,
        out_shape=jax.ShapeDtypeStruct((N, R, GG), jnp.float32),
        grid_spec=pltpu.PrefetchScalarGridSpec(
            num_scalar_prefetch=0,
            grid=(N,),
            in_specs=[
                # Resident side inputs: constant block index -> DMA'd once.
                pl.BlockSpec((R, 4), lambda n: (0, 0)),
                pl.BlockSpec((2, GG), lambda n: (0, 0)),
                # Per-image prediction block, batch dim squeezed.
                pl.BlockSpec((None, R, GG), lambda n: (n, 0, 0)),
            ],
            out_specs=pl.BlockSpec((None, R, GG), lambda n: (n, 0, 0)),
        ),
        compiler_params=pltpu.CompilerParams(
            dimension_semantics=("parallel",),
        ),
    )(params, gxgy, pred)

    # Glue: back to PyTorch output layout (N, A*G*G, 5 + num_classes).
    # This is a full extra HBM round-trip; real consumers should take the
    # lane-dense (N, A*C5, GG) layout directly (kept here for parity testing).
    out = out3d.reshape(N, A, C5, GG).transpose(0, 1, 3, 2).reshape(N, A * GG, C5)
    return out, 0


def yolo_layer_reference(x, anchors, num_classes, img_dim):
    """Pure-JAX reference reproducing the PyTorch forward exactly (targets=None)."""
    N, C, G, _ = x.shape
    A = len(anchors)
    C5 = num_classes + 5
    stride = float(img_dim) / float(G)
    pred = x.astype(jnp.float32).reshape(N, A, C5, G, G).transpose(0, 1, 3, 4, 2)
    xs = jax.nn.sigmoid(pred[..., 0])
    ys = jax.nn.sigmoid(pred[..., 1])
    w = pred[..., 2]
    h = pred[..., 3]
    conf = jax.nn.sigmoid(pred[..., 4])
    cls = jax.nn.sigmoid(pred[..., 5:])
    gx = jnp.arange(G, dtype=jnp.float32).reshape(1, 1, 1, G)
    gy = jnp.arange(G, dtype=jnp.float32).reshape(1, 1, G, 1)
    aw = jnp.array([a[0] / stride for a in anchors], jnp.float32).reshape(1, A, 1, 1)
    ah = jnp.array([a[1] / stride for a in anchors], jnp.float32).reshape(1, A, 1, 1)
    boxes = jnp.stack(
        [xs + gx, ys + gy, jnp.exp(w) * aw, jnp.exp(h) * ah], axis=-1
    ).reshape(N, -1, 4) * stride
    out = jnp.concatenate(
        [boxes, conf.reshape(N, -1, 1), cls.reshape(N, -1, num_classes)], axis=-1
    )
    return out


if __name__ == "__main__":
    key = jax.random.PRNGKey(0)

    num_classes = 3
    anchors = [(10.0, 13.0), (16.0, 30.0), (33.0, 23.0)]   # deterministic "params"
    A = len(anchors)
    C5 = num_classes + 5
    N, G = 2, 16
    img_dim = 416

    x = jax.random.normal(key, (N, A * C5, G, G), dtype=jnp.float32)

    out, _ = yolo_layer_forward(x, anchors, num_classes, img_dim)
    out = jax.block_until_ready(out)

    ref = jax.block_until_ready(yolo_layer_reference(x, anchors, num_classes, img_dim))
    np.testing.assert_allclose(np.asarray(out), np.asarray(ref), rtol=1e-5, atol=1e-5)

    print("KERNEL_OK")
</pallas_src>

<mosaic_0001>
module attributes {stable_mosaic.version = 11 : i64} {
  func.func @_yolo_kernel(%arg0: i32, %arg1: memref<24x4xf32, #tpu.memory_space<vmem>>, %arg2: memref<2x256xf32, #tpu.memory_space<vmem>>, %arg3: memref<1x24x256xf32, #tpu.memory_space<vmem>>, %arg4: memref<1x24x256xf32, #tpu.memory_space<vmem>>) attributes {dimension_semantics = [#tpu.dimension_semantics<parallel>], iteration_bounds = array<i64: 2>, scalar_prefetch = 0 : i64, scratch_operands = 0 : i64, tpu.core_type = #tpu.core_type<tc>, window_params = [{pipeline_mode = #tpu.pipeline_mode<synchronous>, transform_indices = @transform_0, window_bounds = array<i64: 24, 4>}, {pipeline_mode = #tpu.pipeline_mode<synchronous>, transform_indices = @transform_1, window_bounds = array<i64: 2, 256>}, {transform_indices = @transform_2, window_bounds = array<i64: 1, 24, 256>}, {transform_indices = @transform_3, window_bounds = array<i64: 1, 24, 256>}]} {
    %c0 = arith.constant 0 : index
    %c0_0 = arith.constant 0 : index
    %c0_1 = arith.constant 0 : index
    %0 = vector.load %arg3[%c0, %c0_0, %c0_1] : memref<1x24x256xf32, #tpu.memory_space<vmem>>, vector<1x24x256xf32>
    %1 = vector.shape_cast %0 : vector<1x24x256xf32> to vector<24x256xf32>
    %c0_2 = arith.constant 0 : index
    %c0_3 = arith.constant 0 : index
    %2 = vector.load %arg1[%c0_2, %c0_3] : memref<24x4xf32, #tpu.memory_space<vmem>>, vector<24x1xf32>
    %c0_4 = arith.constant 0 : index
    %c1 = arith.constant 1 : index
    %3 = vector.load %arg1[%c0_4, %c1] : memref<24x4xf32, #tpu.memory_space<vmem>>, vector<24x1xf32>
    %cst = arith.constant 5.000000e-01 : f32
    %4 = vector.broadcast %cst : f32 to vector<24x1xf32>
    %5 = arith.cmpf ogt, %3, %4 : vector<24x1xf32>
    %c0_5 = arith.constant 0 : index
    %c2 = arith.constant 2 : index
    %6 = vector.load %arg1[%c0_5, %c2] : memref<24x4xf32, #tpu.memory_space<vmem>>, vector<24x1xf32>
    %c0_6 = arith.constant 0 : index
    %c3 = arith.constant 3 : index
    %7 = vector.load %arg1[%c0_6, %c3] : memref<24x4xf32, #tpu.memory_space<vmem>>, vector<24x1xf32>
    %c0_7 = arith.constant 0 : index
    %c0_8 = arith.constant 0 : index
    %8 = vector.load %arg2[%c0_7, %c0_8] : memref<2x256xf32, #tpu.memory_space<vmem>>, vector<1x256xf32>
    %c1_9 = arith.constant 1 : index
    %c0_10 = arith.constant 0 : index
    %9 = vector.load %arg2[%c1_9, %c0_10] : memref<2x256xf32, #tpu.memory_space<vmem>>, vector<1x256xf32>
    %cst_11 = arith.constant 0.000000e+00 : f32
    %10 = vector.broadcast %cst_11 : f32 to vector<24x256xf32>
    %11 = arith.subf %10, %1 : vector<24x256xf32>
    %12 = vector.shape_cast %5 : vector<24x1xi1> to vector<24x1xi1>
    %13 = vector.broadcast %12 : vector<24x1xi1> to vector<24x256xi1>
    %14 = arith.select %13, %1, %11 : vector<24x256xi1>, vector<24x256xf32>
    %15 = math.exp %14 : vector<24x256xf32>
    %cst_12 = arith.constant 1.000000e+00 : f32
    %16 = vector.broadcast %cst_12 : f32 to vector<24x256xf32>
    %17 = arith.addf %16, %15 : vector<24x256xf32>
    %cst_13 = arith.constant 1.000000e+00 : f32
    %18 = vector.broadcast %cst_13 : f32 to vector<24x256xf32>
    %19 = arith.divf %18, %17 : vector<24x256xf32>
    %20 = vector.shape_cast %5 : vector<24x1xi1> to vector<24x1xi1>
    %21 = vector.broadcast %20 : vector<24x1xi1> to vector<24x256xi1>
    %22 = arith.select %21, %15, %19 : vector<24x256xi1>, vector<24x256xf32>
    %23 = vector.broadcast %6 : vector<24x1xf32> to vector<24x256xf32>
    %24 = vector.broadcast %8 : vector<1x256xf32> to vector<24x256xf32>
    %25 = arith.mulf %23, %24 : vector<24x256xf32>
    %26 = vector.broadcast %7 : vector<24x1xf32> to vector<24x256xf32>
    %27 = vector.broadcast %9 : vector<1x256xf32> to vector<24x256xf32>
    %28 = arith.mulf %26, %27 : vector<24x256xf32>
    %29 = arith.addf %25, %28 : vector<24x256xf32>
    %30 = arith.addf %22, %29 : vector<24x256xf32>
    %31 = vector.broadcast %2 : vector<24x1xf32> to vector<24x256xf32>
    %32 = arith.mulf %30, %31 : vector<24x256xf32>
    %c0_14 = arith.constant 0 : index
    %c0_15 = arith.constant 0 : index
    %c0_16 = arith.constant 0 : index
    %33 = vector.load %arg4[%c0_14, %c0_15, %c0_16] : memref<1x24x256xf32, #tpu.memory_space<vmem>>, vector<1x24x256xf32>
    %34 = vector.shape_cast %33 : vector<1x24x256xf32> to vector<24x256xf32>
    %35 = vector.shape_cast %32 : vector<24x256xf32> to vector<1x24x256xf32>
    tpu.vector_store %arg4[%c0_14, %c0_15, %c0_16], %35 {strides = array<i32>} : memref<1x24x256xf32, #tpu.memory_space<vmem>>, vector<1x24x256xf32>,
    return
  }
  func.func @transform_0(%arg0: i32) -> (i32, i32) {
    %c0_i32 = arith.constant 0 : i32
    %c0_i32_0 = arith.constant 0 : i32
    %c0_i32_1 = arith.constant 0 : i32
    return %c0_i32, %c0_i32_0 : i32, i32
  }
  func.func @transform_1(%arg0: i32) -> (i32, i32) {
    %c0_i32 = arith.constant 0 : i32
    %c0_i32_0 = arith.constant 0 : i32
    %c0_i32_1 = arith.constant 0 : i32
    return %c0_i32, %c0_i32_0 : i32, i32
  }
  func.func @transform_2(%arg0: i32) -> (i32, i32, i32) {
    %c0_i32 = arith.constant 0 : i32
    %c0_i32_0 = arith.constant 0 : i32
    %c0_i32_1 = arith.constant 0 : i32
    return %arg0, %c0_i32, %c0_i32_0 : i32, i32, i32
  }
  func.func @transform_3(%arg0: i32) -> (i32, i32, i32) {
    %c0_i32 = arith.constant 0 : i32
    %c0_i32_0 = arith.constant 0 : i32
    %c0_i32_1 = arith.constant 0 : i32
    return %arg0, %c0_i32, %c0_i32_0 : i32, i32, i32
  }
}

</mosaic_0001>

<llo_original>
// kernel: tpu_custom_call.1
$region0: #{tpu_custom_call.1}
  #allocation0 [shape = 'u32[]', space=smem, size = 0x4, offset = 0x4, fixed_abs, tag = 'smem constant byte address 0x4 - core index']
  #allocation1 [shape = 'u32[144,128]{1,0:T(1,128)}', space=vmem, size = 0x12000, scoped, tag = 'internal scratch']
  %s0 = inlined_call_operand.vmem [shape: f32[24,4], index: 0, kind: input, shape index: {}]
  %s1 = inlined_call_operand.vmem [shape: f32[2,256], index: 1, kind: input, shape index: {}]
  %s2 = inlined_call_operand.hbm [shape: f32[2,24,256], index: 2, kind: input, shape index: {}]
  %s3 = inlined_call_operand.hbm [shape: f32[2,24,256], index: 3, kind: output, shape index: {}]
  %s4 = sld [smem:[#allocation0]]
  $region49: #{tpu_custom_call.1} parent=0
    _
  %s6 = ssub.s32 1, %s4
  %s7 = scalar_select 0, %s6, %s4
  $region1: #{tpu_custom_call.1} parent=0
    #allocation2 [shape = 'u8[49152]{0}', space=vmem, size = 0xc000, scoped, tag = 'input window, operand 2']
    #allocation3 [shape = 's32[2]{0}', space=sflag, size = 0x8, scoped, tag = 'scoped memory for tpu_custom_call.1']
    #allocation4 [shape = 's32[2]{0}', space=sflag, size = 0x8, scoped, tag = 'scoped memory for tpu_custom_call.1']
    #allocation5 [shape = 'u8[49152]{0}', space=vmem, size = 0xc000, scoped, tag = 'output window, operand 0']
    %8 = vsyncpa [#allocation3], 0
    %s9 = scalar_lea.sflag [#allocation3], 1
    %10 = vsyncpa %s9, 0
    %11 = vsyncpa [#allocation4], 0
    %s12 = scalar_lea.sflag [#allocation4], 1
    %13 = vsyncpa %s12, 0
    loop: start=0, step=1, limit=4
    $region2: #{tpu_custom_call.1} parent=1 // loop_pre_header
      _
    $region3: #{tpu_custom_call.1} parent=1 // loop_header
      %s15 = sphi 0, %s19
      %p16 = scmp.ge.s32.totalorder %s15, 4
      %s23 = sphi 0, %s23
      %s25 = sphi 0, %s23
      %s26 = sphi 0, %s25
      %s40 = sphi 0, %s26
      %s44 = sphi 0, %s44
      %s46 = sphi 0, %s44
      %s47 = sphi 0, %s46
      %s61 = sphi 0, %s47
      %s67 = sphi 0, %s69
      %s70 = sphi 0, %s67
      %s71 = sphi 0, %s70
      %s87 = sphi 0, %s71
      %s93 = sphi 0, %s95
      %s96 = sphi 0, %s93
      %s97 = sphi 0, %s96
      %s113 = sphi 0, %s97
    $region4: #{tpu_custom_call.1} parent=1 // loop_header_branch
      %18 = sbr.rel (%p16) target = $region8
    $region5: #{tpu_custom_call.1} parent=1 // loop_body
      %s20 = ssub.s32 %s15, 1
      %s21 = ssub.s32 %s15, 2
      %s22 = sadd.s32 %s15, 1
      %s24 = sadd.s32 %s23, 1
      %p27 = scmp.eq.s32.totalorder %s15, 1
      %p28 = scmp.ne.s32.totalorder %s23, %s25
      %p29 = scmp.eq.s32.totalorder %s15, 0
      %p30 = por %p28, %p29
      %p31 = scmp.ne.s32.totalorder %s23, %s25
      %p32 = scmp.eq.s32.totalorder %s20, 1
      %p33 = por %p31, %p32
      %p34 = scmp.ne.s32.totalorder %s25, %s26
      %p35 = scmp.eq.s32.totalorder %s20, 0
      %p36 = por %p34, %p35
      %p37 = scmp.ne.s32.totalorder %s25, %s26
      %p38 = scmp.eq.s32.totalorder %s21, 1
      %p39 = por %p37, %p38
      %p41 = scmp.ne.s32.totalorder %s26, %s40
      %p42 = scmp.eq.s32.totalorder %s21, 0
      %p43 = por %p41, %p42
      %s45 = sadd.s32 %s44, 1
      %p48 = scmp.eq.s32.totalorder %s15, 1
      %p49 = scmp.ne.s32.totalorder %s44, %s46
      %p50 = scmp.eq.s32.totalorder %s15, 0
      %p51 = por %p49, %p50
      %p52 = scmp.ne.s32.totalorder %s44, %s46
      %p53 = scmp.eq.s32.totalorder %s20, 1
      %p54 = por %p52, %p53
      %p55 = scmp.ne.s32.totalorder %s46, %s47
      %p56 = scmp.eq.s32.totalorder %s20, 0
      %p57 = por %p55, %p56
      %p58 = scmp.ne.s32.totalorder %s46, %s47
      %p59 = scmp.eq.s32.totalorder %s21, 1
      %p60 = por %p58, %p59
      %p62 = scmp.ne.s32.totalorder %s47, %s61
      %p63 = scmp.eq.s32.totalorder %s21, 0
      %p64 = por %p62, %p63
      %s65 = ssub.s32 %s15, %s22
      %p66 = scmp.eq.s32.totalorder %s65, 0
      %s68 = sadd.s32 %s67, 1
      %s69 = scalar_select %p66, %s67, %s68
      %p72 = pneg %p66
      %p73 = scmp.eq.s32.totalorder %s15, 1
      %p74 = por %p72, %p73
      %p75 = scmp.ne.s32.totalorder %s67, %s70
      %p76 = scmp.eq.s32.totalorder %s15, 0
      %p77 = por %p75, %p76
      %p78 = scmp.ne.s32.totalorder %s67, %s70
      %p79 = scmp.eq.s32.totalorder %s20, 1
      %p80 = por %p78, %p79
      %p81 = scmp.ne.s32.totalorder %s70, %s71
      %p82 = scmp.eq.s32.totalorder %s20, 0
      %p83 = por %p81, %p82
      %p84 = scmp.ne.s32.totalorder %s70, %s71
      %p85 = scmp.eq.s32.totalorder %s21, 1
      %p86 = por %p84, %p85
      %p88 = scmp.ne.s32.totalorder %s71, %s87
      %p89 = scmp.eq.s32.totalorder %s21, 0
      %p90 = por %p88, %p89
      %s91 = ssub.s32 %s15, %s22
      %p92 = scmp.eq.s32.totalorder %s91, 0
      %s94 = sadd.s32 %s93, 1
      %s95 = scalar_select %p92, %s93, %s94
      %p98 = pneg %p92
      %p99 = scmp.eq.s32.totalorder %s15, 1
      %p100 = por %p98, %p99
      %p101 = scmp.ne.s32.totalorder %s93, %s96
      %p102 = scmp.eq.s32.totalorder %s15, 0
      %p103 = por %p101, %p102
      %p104 = scmp.ne.s32.totalorder %s93, %s96
      %p105 = scmp.eq.s32.totalorder %s20, 1
      %p106 = por %p104, %p105
      %p107 = scmp.ne.s32.totalorder %s96, %s97
      %p108 = scmp.eq.s32.totalorder %s20, 0
      %p109 = por %p107, %p108
      %p110 = scmp.ne.s32.totalorder %s96, %s97
      %p111 = scmp.eq.s32.totalorder %s21, 1
      %p112 = por %p110, %p111
      %p114 = scmp.ne.s32.totalorder %s97, %s113
      %p115 = scmp.eq.s32.totalorder %s21, 0
      %p116 = por %p114, %p115
      %p117 = scmp.le.s32.totalorder 1, %s15
      %p118 = scmp.lt.s32.totalorder %s15, 3
      %p119 = pnand %p117, %p118
      %p120 = pneg %p119
      // Predicated region
      $region9: #{tpu_custom_call.1} parent=5 // pred_check
        _
      $region10: #{tpu_custom_call.1} parent=5 // pred_check_branch
        %122 = sbr.rel (%p119) target = $region12
      $region11: #{tpu_custom_call.1} parent=5 // pred_region
        %s123 = ssub.s32 %s15, 1
        // Predicated region
        $region13: #{tpu_custom_call.1} parent=11 // pred_check
          %p124 = pneg %p36
        $region14: #{tpu_custom_call.1} parent=11 // pred_check_branch
          %126 = sbr.rel (%p124) target = $region16
        $region15: #{tpu_custom_call.1} parent=11 // pred_region
          _
        $region16: #{tpu_custom_call.1} parent=11 // pred_fallthru
          _
        // Predicated region
        $region17: #{tpu_custom_call.1} parent=11 // pred_check
          %p127 = pneg %p57
        $region18: #{tpu_custom_call.1} parent=11 // pred_check_branch
          %129 = sbr.rel (%p127) target = $region20
        $region19: #{tpu_custom_call.1} parent=11 // pred_region
          _
        $region20: #{tpu_custom_call.1} parent=11 // pred_fallthru
          _
      $region12: #{tpu_custom_call.1} parent=5 // pred_fallthru
        _
      %p130 = scmp.lt.s32.totalorder %s15, 2
      // Predicated region
      $region21: #{tpu_custom_call.1} parent=5 // pred_check
        %p131 = pneg %p130
      $region22: #{tpu_custom_call.1} parent=5 // pred_check_branch
        %133 = sbr.rel (%p131) target = $region24
      $region23: #{tpu_custom_call.1} parent=5 // pred_region
        // Predicated region
        $region25: #{tpu_custom_call.1} parent=23 // pred_check
          %p134 = pneg %p77
        $region26: #{tpu_custom_call.1} parent=23 // pred_check_branch
          %136 = sbr.rel (%p134) target = $region28
        $region27: #{tpu_custom_call.1} parent=23 // pred_region
          %s137 = sand.u32 %s67, 1
          %s138 = scalar_lea.sflag [#allocation3], %s137
          %s139 = sand.u32 %s67, 1
          %s140 = smul.addr %s139, 48
          %s141 = scalar_lea.vmem [#allocation2], %s140
          %s143 = ssub.s32 768, 768
          %144 = vsyncadd %s138, %s143
          %s145 = smul.addr %s15, 6
          %s146 = smul.addr %s145, 128
          %s147 = scalar_lea.hbm %s2, %s146
          %s148 = sshll.u32 %s141, 4
          %s149 = int_to_ptr.vmem [resolvable:$true] %s148
          %154 = dma.hbm_to_vmem [thread:$0]  %s147, 768, %s149, %s138, 256, 256, 16
        $region28: #{tpu_custom_call.1} parent=23 // pred_fallthru
          _
      $region24: #{tpu_custom_call.1} parent=5 // pred_fallthru
        _
      %p155 = scmp.le.s32.totalorder 1, %s15
      %p156 = scmp.lt.s32.totalorder %s15, 3
      %p157 = pnand %p155, %p156
      %p158 = pneg %p157
      // Predicated region
      $region29: #{tpu_custom_call.1} parent=5 // pred_check
        _
      $region30: #{tpu_custom_call.1} parent=5 // pred_check_branch
        %160 = sbr.rel (%p157) target = $region32
      $region31: #{tpu_custom_call.1} parent=5 // pred_region
        %s161 = ssub.s32 %s15, 1
        %s162 = sand.u32 %s70, 1
        %s163 = scalar_lea.sflag [#allocation3], %s162
        %s164 = sand.u32 %s70, 1
        %s165 = smul.addr %s164, 48
        %s166 = scalar_lea.vmem [#allocation2], %s165
        // Predicated region
        $region33: #{tpu_custom_call.1} parent=31 // pred_check
          %p167 = pneg %p83
        $region34: #{tpu_custom_call.1} parent=31 // pred_check_branch
          %169 = sbr.rel (%p167) target = $region36
        $region35: #{tpu_custom_call.1} parent=31 // pred_region
          %170 = dma.done %s163, 768
        $region36: #{tpu_custom_call.1} parent=31 // pred_fallthru
          _
        %p171 = pneg %p36
        %p172 = pneg %p33
        %p173 = pneg %p57
        %p174 = pneg %p54
        %s175 = sand.u32 %s70, 1
        %s176 = scalar_lea.sflag [#allocation3], %s175
        %s177 = sand.u32 %s70, 1
        %s178 = smul.addr %s177, 48
        %s179 = scalar_lea.vmem [#allocation2], %s178
        %p180 = pneg %p83
        %p181 = pneg %p80
        %p182 = pneg %p109
        %p183 = pneg %p106
        %s184 = sand.u32 %s96, 1
        %s185 = scalar_lea.sflag [#allocation4], %s184
        %s186 = sand.u32 %s96, 1
        %s187 = smul.addr %s186, 48
        %s188 = scalar_lea.vmem [#allocation5], %s187
        %v189 = vld [vmem:[%s166] sm:$0xff]
        %v190 = vld [vmem:[%s166 + $0x8] sm:$0xff]
        %v191 = vld [vmem:[%s166 + $0x10] sm:$0xff]
        %v192 = vld [vmem:[%s166 + $0x18] sm:$0xff]
        %v193 = vld [vmem:[%s166 + $0x20] sm:$0xff]
        %v194 = vld [vmem:[%s166 + $0x28] sm:$0xff]
        %v195 = vld [vmem:[%s0] sm:$0xff]
        %v196 = vld [vmem:[%s0 + $0x8] sm:$0xff]
        %v197 = vld [vmem:[%s0 + $0x10] sm:$0xff]
        %vm198 = vcmp.gt.f32.partialorder %v195, 0.5
        %vm199 = vcmp.gt.f32.partialorder %v196, 0.5
        %vm200 = vcmp.gt.f32.partialorder %v197, 0.5
        %v201 = vld [vmem:[%s1] ss:$2 sm:$0x3]
        %s202 = scalar_lea.vmem %s1, 1
        %v203 = vld [vmem:[%s202] ss:$2 sm:$0x3]
        %v204 = vsub.f32 0.0, %v189
        %v205 = vsub.f32 0.0, %v190
        %v206 = vsub.f32 0.0, %v191
        %v207 = vsub.f32 0.0, %v192
        %v208 = vsub.f32 0.0, %v193
        %v209 = vsub.f32 0.0, %v194
        %v210 = vsel %vm198, 1, 0
        %v211 = vsel %vm199, 1, 0
        %v212 = vsel %vm200, 1, 0
        %213 = vset.pattern.permute.xlu0 1
        %214 = vperm.xlu0 %213, %v210
        %v215 = vpop.permute.xlu0 %214
        %216 = vset.pattern.permute.xlu0 1
        %217 = vperm.xlu0 %216, %v211
        %v218 = vpop.permute.xlu0 %217
        %219 = vset.pattern.permute.xlu0 1
        %220 = vperm.xlu0 %219, %v212
        %v221 = vpop.permute.xlu0 %220
        %vm222 = vcmp.eq.s32.totalorder %v215, 1
        %vm223 = vcmp.eq.s32.totalorder %v218, 1
        %vm224 = vcmp.eq.s32.totalorder %v221, 1
        %v225 = vsel %vm222, %v189, %v204
        %v226 = vsel %vm222, %v190, %v205
        %v227 = vsel %vm223, %v191, %v206
        %v228 = vsel %vm223, %v192, %v207
        %v229 = vsel %vm224, %v193, %v208
        %v230 = vsel %vm224, %v194, %v209
        %v231 = vmul.f32 %v225, 1.442695
        %v232 = vpow.pop %v231
        %v233 = vmul.f32 %v226, 1.442695
        %v234 = vpow.pop %v233
        %v235 = vmul.f32 %v227, 1.442695
        %v236 = vpow.pop %v235
        %v237 = vmul.f32 %v228, 1.442695
        %v238 = vpow.pop %v237
        %v239 = vmul.f32 %v229, 1.442695
        %v240 = vpow.pop %v239
        %v241 = vmul.f32 %v230, 1.442695
        %v242 = vpow.pop %v241
        %v243 = vadd.f32 %v232, 1.0
        %v244 = vadd.f32 %v234, 1.0
        %v245 = vadd.f32 %v236, 1.0
        %v246 = vadd.f32 %v238, 1.0
        %v247 = vadd.f32 %v240, 1.0
        %v248 = vadd.f32 %v242, 1.0
        %v249 = vrcp.pop %v243
        %v250 = vmul.f32 1.0, %v249
        %v251 = vrcp.pop %v244
        %v252 = vmul.f32 1.0, %v251
        %v253 = vrcp.pop %v245
        %v254 = vmul.f32 1.0, %v253
        %v255 = vrcp.pop %v246
        %v256 = vmul.f32 1.0, %v255
        %v257 = vrcp.pop %v247
        %v258 = vmul.f32 1.0, %v257
        %v259 = vrcp.pop %v248
        %v260 = vmul.f32 1.0, %v259
        %v261 = vsel %vm222, %v232, %v250
        %v262 = vsel %vm222, %v234, %v252
        %v263 = vsel %vm223, %v236, %v254
        %v264 = vsel %vm223, %v238, %v256
        %v265 = vsel %vm224, %v240, %v258
        %v266 = vsel %vm224, %v242, %v260
        %268 = vset.pattern.permute.xlu0 2
        %269 = vperm.xlu0 %268, %v195
        %v270 = vpop.permute.xlu0 %269
        %273 = vset.pattern.permute.xlu0 2
        %274 = vperm.xlu0 %273, %v196
        %v275 = vpop.permute.xlu0 %274
        %278 = vset.pattern.permute.xlu0 2
        %279 = vperm.xlu0 %278, %v197
        %v280 = vpop.permute.xlu0 %279
        %v283 = vlaneseq
        %v284 = vshrl.u32 %v283, 7
        %v285 = vsub.s32 0, %v284
        %v286 = vrot.slane %v201, %v285
        %v287 = vlaneseq
        %v288 = vshrl.u32 %v287, 7
        %v289 = vsub.s32 1, %v288
        %v290 = vrot.slane %v201, %v289
        %v293 = vmul.f32 %v270, %v286
        %v294 = vmul.f32 %v270, %v290
        %v295 = vmul.f32 %v275, %v286
        %v296 = vmul.f32 %v275, %v290
        %v297 = vmul.f32 %v280, %v286
        %v298 = vmul.f32 %v280, %v290
        %299 = vset.pattern.permute.xlu0 3
        %300 = vperm.xlu0 %299, %v195
        %v301 = vpop.permute.xlu0 %300
        %303 = vset.pattern.permute.xlu0 3
        %304 = vperm.xlu0 %303, %v196
        %v305 = vpop.permute.xlu0 %304
        %307 = vset.pattern.permute.xlu0 3
        %308 = vperm.xlu0 %307, %v197
        %v309 = vpop.permute.xlu0 %308
        %v312 = vlaneseq
        %v313 = vshrl.u32 %v312, 7
        %v314 = vsub.s32 0, %v313
        %v315 = vrot.slane %v203, %v314
        %v316 = vlaneseq
        %v317 = vshrl.u32 %v316, 7
        %v318 = vsub.s32 1, %v317
        %v319 = vrot.slane %v203, %v318
        %v322 = vmul.f32 %v301, %v315
        %v323 = vmul.f32 %v301, %v319
        %v324 = vmul.f32 %v305, %v315
        %v325 = vmul.f32 %v305, %v319
        %v326 = vmul.f32 %v309, %v315
        %v327 = vmul.f32 %v309, %v319
        %v328 = vadd.f32 %v293, %v322
        %v329 = vadd.f32 %v294, %v323
        %v330 = vadd.f32 %v295, %v324
        %v331 = vadd.f32 %v296, %v325
        %v332 = vadd.f32 %v297, %v326
        %v333 = vadd.f32 %v298, %v327
        %v334 = vadd.f32 %v261, %v328
        %v335 = vadd.f32 %v262, %v329
        %v336 = vadd.f32 %v263, %v330
        %v337 = vadd.f32 %v264, %v331
        %v338 = vadd.f32 %v265, %v332
        %v339 = vadd.f32 %v266, %v333
        %340 = vset.pattern.permute.xlu0 0
        %341 = vperm.xlu0 %340, %v195
        %v342 = vpop.permute.xlu0 %341
        %344 = vset.pattern.permute.xlu0 0
        %345 = vperm.xlu0 %344, %v196
        %v346 = vpop.permute.xlu0 %345
        %348 = vset.pattern.permute.xlu0 0
        %349 = vperm.xlu0 %348, %v197
        %v350 = vpop.permute.xlu0 %349
        %v352 = vmul.f32 %v334, %v342
        %v353 = vmul.f32 %v335, %v342
        %v354 = vmul.f32 %v336, %v346
        %v355 = vmul.f32 %v337, %v346
        %v356 = vmul.f32 %v338, %v350
        %v357 = vmul.f32 %v339, %v350
        %358 = vst [vmem:[%s188] sm:$0xff] %v352
        %359 = vst [vmem:[%s188 + $0x8] sm:$0xff] %v353
        %360 = vst [vmem:[%s188 + $0x10] sm:$0xff] %v354
        %361 = vst [vmem:[%s188 + $0x18] sm:$0xff] %v355
        %362 = vst [vmem:[%s188 + $0x20] sm:$0xff] %v356
        %363 = vst [vmem:[%s188 + $0x28] sm:$0xff] %v357
        %s364 = sand.u32 %s96, 1
        %s365 = scalar_lea.sflag [#allocation4], %s364
        %s366 = sand.u32 %s96, 1
        %s367 = smul.addr %s366, 48
        %s368 = scalar_lea.vmem [#allocation5], %s367
        // Predicated region
        $region37: #{tpu_custom_call.1} parent=31 // pred_check
          %p369 = pneg %p106
        $region38: #{tpu_custom_call.1} parent=31 // pred_check_branch
          %371 = sbr.rel (%p369) target = $region40
        $region39: #{tpu_custom_call.1} parent=31 // pred_region
          %s373 = ssub.s32 768, 768
          %374 = vsyncadd %s365, %s373
          %s375 = smul.addr %s20, 6
          %s376 = smul.addr %s375, 128
          %s377 = scalar_lea.hbm %s3, %s376
          %s378 = sshll.u32 %s368, 4
          %s379 = int_to_ptr.vmem [resolvable:$true] %s378
          %384 = dma.vmem_to_hbm [thread:$0]  %s379, 768, %s377, %s365, 256, 256, 16
        $region40: #{tpu_custom_call.1} parent=31 // pred_fallthru
          _
      $region32: #{tpu_custom_call.1} parent=5 // pred_fallthru
        _
      %p385 = scmp.le.s32.totalorder 2, %s15
      // Predicated region
      $region41: #{tpu_custom_call.1} parent=5 // pred_check
        %p386 = pneg %p385
      $region42: #{tpu_custom_call.1} parent=5 // pred_check_branch
        %388 = sbr.rel (%p386) target = $region44
      $region43: #{tpu_custom_call.1} parent=5 // pred_region
        %s389 = ssub.s32 %s15, 2
        // Predicated region
        $region45: #{tpu_custom_call.1} parent=43 // pred_check
          %p390 = pneg %p112
        $region46: #{tpu_custom_call.1} parent=43 // pred_check_branch
          %392 = sbr.rel (%p390) target = $region48
        $region47: #{tpu_custom_call.1} parent=43 // pred_region
          %s393 = sand.u32 %s97, 1
          %s394 = scalar_lea.sflag [#allocation4], %s393
          %s395 = sand.u32 %s97, 1
          %s396 = smul.addr %s395, 48
          %s397 = scalar_lea.vmem [#allocation5], %s396
          %398 = dma.done %s394, 768
        $region48: #{tpu_custom_call.1} parent=43 // pred_fallthru
          _
      $region44: #{tpu_custom_call.1} parent=5 // pred_fallthru
        _
    $region6: #{tpu_custom_call.1} parent=1 // loop_footer
      %s19 = sadd.s32 1, %s15
    $region7: #{tpu_custom_call.1} parent=1 // loop_footer_branch
      %14 = sbr.rel target = $region3
    $region8: #{tpu_custom_call.1} parent=1 // loop_exit
      _
    %399 = vsyncpa [#allocation3], 1
    %s400 = scalar_lea.sflag [#allocation3], 1
    %401 = vsyncpa %s400, 1
    %402 = vsyncpa [#allocation4], 1
    %s403 = scalar_lea.sflag [#allocation4], 1
    %404 = vsyncpa %s403, 1

</llo_original>
